<compile_context>
chip_gen: v6e
topology: v6e:2x2x1
jax: 0.10.0
libtpu: 0.0.40
codegen_flags: <defaults>
</compile_context>

<pallas_src>
import numpy as np
import jax
import jax.numpy as jnp
from jax.experimental import pallas as pl
from jax.experimental.pallas import tpu as pltpu

N_POI = 52  # mapping references indices up to 51


def build_flip_permutation():
    """Replicates PoIHorizontalFlip.flipped_poi_mapping() + the swap loop."""
    mapping = np.zeros(28, dtype=np.int32)
    for i in range(4):
        mapping[i] = i
    for i in range(4):
        mapping[4 + i] = 51 - i
    for i in range(14):
        mapping[8 + i] = 45 - i
    for i in range(2):
        mapping[22 + i] = 47 - i
    for i in range(4):
        mapping[24 + i] = 31 - i

    # Forward loop writes t[idx1] <- f(src[idx2]) and t[idx2] <- f(src[idx1]);
    # the mapping pairs indices bijectively, so it is this involution:
    perm = np.zeros(N_POI, dtype=np.int32)
    for idx1 in range(28):
        idx2 = int(mapping[idx1])
        perm[idx1] = idx2
        perm[idx2] = idx1
    return perm


def build_perm_matrix_t(perm):
    """P^T such that (X @ P^T)[:, k] == X[:, perm[k]].  Entries 0/1 -> exact in bf16."""
    p = np.eye(N_POI, dtype=np.float32)[perm]      # P[k, :] = e_{perm[k]}
    return jnp.asarray(p.T, dtype=jnp.bfloat16)    # (52, 52) bf16


def poi_hflip_kernel(x_ref, pt_ref, sel_ref, o_ref):
    # x_ref : (3B, 52) f32 — rows [0,B)=x, [B,2B)=y, [2B,3B)=nonzeros
    # pt_ref: (52, 52) bf16 permutation matrix transpose
    # sel_ref: (B, 1) f32 — per-sample flip decision (1.0 = flip)
    # o_ref : (3B, 52) f32
    b = sel_ref.shape[0]

    x = x_ref[...]
    pt = pt_ref[...].astype(jnp.float32)           # exact: entries are 0/1
    # Gather-by-permutation on the MXU along the lane (PoI) axis.
    y = jnp.dot(x, pt, preferred_element_type=jnp.float32)  # (3B, 52)

    flip = sel_ref[...] > 0.0                       # (B, 1) broadcasts over 52 lanes

    # x plane: apply 1 - x only when flipping; y / nonzeros planes: permute only.
    o_ref[:b, :] = jnp.where(flip, 1.0 - y[:b, :], x[:b, :])
    o_ref[b:2 * b, :] = jnp.where(flip, y[b:2 * b, :], x[b:2 * b, :])
    o_ref[2 * b:, :] = jnp.where(flip, y[2 * b:, :], x[2 * b:, :])


def poi_horizontal_flip(poi, nonzeros, flags, pt_bf16):
    """Batched flip.

    poi:      (B, 52, 2) float32
    nonzeros: (B, 52)    float32
    flags:    (B,)       0/1 per-sample flip decisions (== torch.rand(1) < p)
    pt_bf16:  (52, 52)   bf16 permutation-matrix transpose
    """
    B = poi.shape[0]
    x_plane = poi[:, :, 0].astype(jnp.float32)       # (B, 52)
    y_plane = poi[:, :, 1].astype(jnp.float32)       # (B, 52)
    nz_plane = nonzeros.astype(jnp.float32)          # (B, 52)
    slab = jnp.concatenate([x_plane, y_plane, nz_plane], axis=0)  # (3B, 52)
    sel = flags.astype(jnp.float32).reshape(B, 1)

    out = pl.pallas_call(
        poi_hflip_kernel,
        out_shape=jax.ShapeDtypeStruct((3 * B, N_POI), jnp.float32),
        in_specs=[
            pl.BlockSpec(memory_space=pltpu.MemorySpace.VMEM),  # slab
            pl.BlockSpec(memory_space=pltpu.MemorySpace.VMEM),  # P^T (bf16)
            pl.BlockSpec(memory_space=pltpu.MemorySpace.VMEM),  # per-sample flags
        ],
        out_specs=pl.BlockSpec(memory_space=pltpu.MemorySpace.VMEM),
    )(slab, pt_bf16, sel)

    out_x = out[:B]
    out_y = out[B:2 * B]
    out_nz = out[2 * B:]
    out_poi = jnp.stack([out_x, out_y], axis=-1)     # (B, 52, 2)
    return out_poi.astype(poi.dtype), out_nz.astype(nonzeros.dtype)


if __name__ == "__main__":
    key = jax.random.PRNGKey(0)
    k1, k2, k3 = jax.random.split(key, 3)

    p = 0.5
    B = 8  # batch of independent samples per launch (3B = 24 sublane rows)

    poi = jax.random.uniform(k1, (B, N_POI, 2), dtype=jnp.float32)
    nonzeros = (jax.random.uniform(k2, (B, N_POI)) > 0.3).astype(jnp.float32)

    # Per-sample Bernoulli decision equivalent to `torch.rand(1) < self.p`,
    # made deterministic.  (RNG stays outside the kernel, like torch.rand.)
    u = jax.random.uniform(k3, (B,))
    flags = (u < p).astype(jnp.int32)

    perm = build_flip_permutation()
    pt_bf16 = build_perm_matrix_t(perm)

    out_poi, out_nz = poi_horizontal_flip(poi, nonzeros, flags, pt_bf16)
    jax.block_until_ready((out_poi, out_nz))

    # Pure-numpy reference of the PyTorch forward, applied per sample.
    poi_np = np.asarray(poi)
    nz_np = np.asarray(nonzeros)
    flags_np = np.asarray(flags)
    ref_poi = np.empty_like(poi_np)
    ref_nz = np.empty_like(nz_np)
    for b in range(B):
        if flags_np[b] > 0:
            t = poi_np[b][perm].copy()
            t[:, 0] = 1.0 - t[:, 0]
            ref_poi[b] = t
            ref_nz[b] = nz_np[b][perm]
        else:
            ref_poi[b] = poi_np[b]
            ref_nz[b] = nz_np[b]

    assert np.allclose(np.asarray(out_poi), ref_poi, atol=1e-6)
    assert np.allclose(np.asarray(out_nz), ref_nz, atol=1e-6)

    print("KERNEL_OK")
</pallas_src>

<mosaic_0001>
module attributes {stable_mosaic.version = 11 : i64} {
  func.func @poi_hflip_kernel(%arg0: memref<24x52xf32, #tpu.memory_space<vmem>>, %arg1: memref<52x52xbf16, #tpu.memory_space<vmem>>, %arg2: memref<8x1xf32, #tpu.memory_space<vmem>>, %arg3: memref<24x52xf32, #tpu.memory_space<vmem>>) attributes {dimension_semantics = [], scalar_prefetch = 0 : i64, scratch_operands = 0 : i64, tpu.core_type = #tpu.core_type<tc>} {
    %c0 = arith.constant 0 : index
    %c0_0 = arith.constant 0 : index
    %0 = vector.load %arg0[%c0, %c0_0] : memref<24x52xf32, #tpu.memory_space<vmem>>, vector<24x52xf32>
    %c0_1 = arith.constant 0 : index
    %c0_2 = arith.constant 0 : index
    %1 = vector.load %arg1[%c0_1, %c0_2] : memref<52x52xbf16, #tpu.memory_space<vmem>>, vector<52x52xbf16>
    %2 = arith.extf %1 : vector<52x52xbf16> to vector<52x52xf32>
    %cst = arith.constant dense<0.000000e+00> : vector<24x52xf32>
    %3 = tpu.matmul %0, %2, %cst {dimension_numbers = #tpu.dot_dimension_numbers<[1], [0], [0], [1], [0, 0, 1, 1], [], []>} : vector<24x52xf32>, vector<52x52xf32>, vector<24x52xf32> -> vector<24x52xf32>
    %c0_3 = arith.constant 0 : index
    %c0_4 = arith.constant 0 : index
    %4 = vector.load %arg2[%c0_3, %c0_4] : memref<8x1xf32, #tpu.memory_space<vmem>>, vector<8x1xf32>
    %cst_5 = arith.constant 0.000000e+00 : f32
    %5 = vector.broadcast %cst_5 : f32 to vector<8x1xf32>
    %6 = arith.cmpf ogt, %4, %5 : vector<8x1xf32>
    %7 = vector.extract_strided_slice %3 {offsets = [0, 0], sizes = [8, 52], strides = [1, 1]} : vector<24x52xf32> to vector<8x52xf32>
    %cst_6 = arith.constant 1.000000e+00 : f32
    %8 = vector.broadcast %cst_6 : f32 to vector<8x52xf32>
    %9 = arith.subf %8, %7 : vector<8x52xf32>
    %10 = vector.extract_strided_slice %0 {offsets = [0, 0], sizes = [8, 52], strides = [1, 1]} : vector<24x52xf32> to vector<8x52xf32>
    %11 = vector.shape_cast %6 : vector<8x1xi1> to vector<8x1xi1>
    %12 = vector.broadcast %11 : vector<8x1xi1> to vector<8x52xi1>
    %13 = arith.select %12, %9, %10 : vector<8x52xi1>, vector<8x52xf32>
    %c0_7 = arith.constant 0 : index
    %c0_8 = arith.constant 0 : index
    %14 = vector.load %arg3[%c0_7, %c0_8] : memref<24x52xf32, #tpu.memory_space<vmem>>, vector<8x52xf32>
    tpu.vector_store %arg3[%c0_7, %c0_8], %13 {strides = array<i32>} : memref<24x52xf32, #tpu.memory_space<vmem>>, vector<8x52xf32>,
    %15 = vector.extract_strided_slice %3 {offsets = [8, 0], sizes = [8, 52], strides = [1, 1]} : vector<24x52xf32> to vector<8x52xf32>
    %16 = vector.extract_strided_slice %0 {offsets = [8, 0], sizes = [8, 52], strides = [1, 1]} : vector<24x52xf32> to vector<8x52xf32>
    %17 = vector.shape_cast %6 : vector<8x1xi1> to vector<8x1xi1>
    %18 = vector.broadcast %17 : vector<8x1xi1> to vector<8x52xi1>
    %19 = arith.select %18, %15, %16 : vector<8x52xi1>, vector<8x52xf32>
    %c8 = arith.constant 8 : index
    %c0_9 = arith.constant 0 : index
    %20 = vector.load %arg3[%c8, %c0_9] : memref<24x52xf32, #tpu.memory_space<vmem>>, vector<8x52xf32>
    tpu.vector_store %arg3[%c8, %c0_9], %19 {strides = array<i32>} : memref<24x52xf32, #tpu.memory_space<vmem>>, vector<8x52xf32>,
    %21 = vector.extract_strided_slice %3 {offsets = [16, 0], sizes = [8, 52], strides = [1, 1]} : vector<24x52xf32> to vector<8x52xf32>
    %22 = vector.extract_strided_slice %0 {offsets = [16, 0], sizes = [8, 52], strides = [1, 1]} : vector<24x52xf32> to vector<8x52xf32>
    %23 = vector.shape_cast %6 : vector<8x1xi1> to vector<8x1xi1>
    %24 = vector.broadcast %23 : vector<8x1xi1> to vector<8x52xi1>
    %25 = arith.select %24, %21, %22 : vector<8x52xi1>, vector<8x52xf32>
    %c16 = arith.constant 16 : index
    %c0_10 = arith.constant 0 : index
    %26 = vector.load %arg3[%c16, %c0_10] : memref<24x52xf32, #tpu.memory_space<vmem>>, vector<8x52xf32>
    tpu.vector_store %arg3[%c16, %c0_10], %25 {strides = array<i32>} : memref<24x52xf32, #tpu.memory_space<vmem>>, vector<8x52xf32>,
    return
  }
}

</mosaic_0001>

<llo_original>
// kernel: tpu_custom_call.1
$region0: #{tpu_custom_call.1}
  #allocation0 [shape = 'u32[]', space=smem, size = 0x4, offset = 0x4, fixed_abs, tag = 'smem constant byte address 0x4 - core index']
  #allocation1 [shape = 'u32[144,128]{1,0:T(1,128)}', space=vmem, size = 0x12000, scoped, tag = 'internal scratch']
  %s0 = inlined_call_operand.hbm [shape: f32[24,52], index: 0, kind: input, shape index: {}]
  %s1 = inlined_call_operand.hbm [shape: bf16[52,52], index: 1, kind: input, shape index: {}]
  %s2 = inlined_call_operand.vmem [shape: f32[8,1], index: 2, kind: input, shape index: {}]
  %s3 = inlined_call_operand.hbm [shape: f32[24,52], index: 3, kind: output, shape index: {}]
  %s4 = sld [smem:[#allocation0]]
  $region30: #{tpu_custom_call.1} parent=0
    _
  %s6 = ssub.s32 1, %s4
  %s7 = scalar_select 0, %s6, %s4
  $region1: #{tpu_custom_call.1} parent=0
    #allocation2 [shape = 'u8[12288]{0}', space=vmem, size = 0x3000, scoped, tag = 'input window, operand 0, single buffered']
    #allocation3 [shape = 's32[1]{0}', space=sflag, size = 0x4, scoped, tag = 'scoped memory for tpu_custom_call.1']
    #allocation4 [shape = 's32[1]{0}', space=sflag, size = 0x4, scoped, tag = 'scoped memory for tpu_custom_call.1']
    #allocation5 [shape = 'u8[14336]{0}', space=vmem, size = 0x3800, scoped, tag = 'input window, operand 1, single buffered']
    #allocation6 [shape = 's32[1]{0}', space=sflag, size = 0x4, scoped, tag = 'scoped memory for tpu_custom_call.1']
    #allocation7 [shape = 'u8[12288]{0}', space=vmem, size = 0x3000, scoped, tag = 'output window, operand 0, single buffered']
    %8 = vsyncpa [#allocation3], 0
    %9 = vsyncpa [#allocation6], 0
    %10 = vsyncpa [#allocation4], 0
    // Predicated region
    $region2: #{tpu_custom_call.1} parent=1 // pred_check
      _
    $region3: #{tpu_custom_call.1} parent=1 // pred_check_branch
      %12 = sbr.rel (0) target = $region5
    $region4: #{tpu_custom_call.1} parent=1 // pred_region
      %s14 = ssub.s32 384, 384
      %15 = vsyncadd [#allocation3], %s14
      %s16 = sshll.u32 [#allocation2], 4
      %s17 = int_to_ptr.vmem [resolvable:$true] %s16
      %22 = dma.hbm_to_vmem [thread:$0]  %s0, 384, %s17, [#allocation3], 128, 128, 8
    $region5: #{tpu_custom_call.1} parent=1 // pred_fallthru
      _
    // Predicated region
    $region6: #{tpu_custom_call.1} parent=1 // pred_check
      _
    $region7: #{tpu_custom_call.1} parent=1 // pred_check_branch
      %24 = sbr.rel (0) target = $region9
    $region8: #{tpu_custom_call.1} parent=1 // pred_region
      %s26 = ssub.s32 448, 448
      %27 = vsyncadd [#allocation6], %s26
      %s28 = sshll.u32 [#allocation5], 4
      %s29 = int_to_ptr.vmem [resolvable:$true] %s28
      %34 = dma.hbm_to_vmem [thread:$0]  %s1, 448, %s29, [#allocation6], 64, 64, 4
    $region9: #{tpu_custom_call.1} parent=1 // pred_fallthru
      _
    // Predicated region
    $region10: #{tpu_custom_call.1} parent=1 // pred_check
      _
    $region11: #{tpu_custom_call.1} parent=1 // pred_check_branch
      %36 = sbr.rel (0) target = $region13
    $region12: #{tpu_custom_call.1} parent=1 // pred_region
      _
    $region13: #{tpu_custom_call.1} parent=1 // pred_fallthru
      _
    // Predicated region
    $region14: #{tpu_custom_call.1} parent=1 // pred_check
      _
    $region15: #{tpu_custom_call.1} parent=1 // pred_check_branch
      %38 = sbr.rel (0) target = $region17
    $region16: #{tpu_custom_call.1} parent=1 // pred_region
      %39 = dma.done [#allocation3], 384
    $region17: #{tpu_custom_call.1} parent=1 // pred_fallthru
      _
    // Predicated region
    $region18: #{tpu_custom_call.1} parent=1 // pred_check
      _
    $region19: #{tpu_custom_call.1} parent=1 // pred_check_branch
      %41 = sbr.rel (0) target = $region21
    $region20: #{tpu_custom_call.1} parent=1 // pred_region
      %42 = dma.done [#allocation6], 448
    $region21: #{tpu_custom_call.1} parent=1 // pred_fallthru
      _
    %v43 = vld [vmem:[#allocation2] sm:$0xff]
    %v44 = vld [vmem:[#allocation2 + $0x8] sm:$0xff]
    %v45 = vld [vmem:[#allocation2 + $0x10] sm:$0xff]
    %v46 = vld [vmem:[#allocation5] sm:$0xf]
    %v47 = vld [vmem:[#allocation5 + $0x4] sm:$0xf]
    %v48 = vld [vmem:[#allocation5 + $0x8] sm:$0xf]
    %v49 = vld [vmem:[#allocation5 + $0xc] sm:$0xf]
    %v50 = vld [vmem:[#allocation5 + $0x10] sm:$0xf]
    %v51 = vld [vmem:[#allocation5 + $0x14] sm:$0xf]
    %v52 = vld [vmem:[#allocation5 + $0x18] sm:$0x3]
    %v53 = vunpack.c.l.bf16 %v46
    %v54 = vunpack.c.l.bf16 %v47
    %v55 = vunpack.c.l.bf16 %v48
    %v56 = vunpack.c.l.bf16 %v49
    %v57 = vunpack.c.l.bf16 %v50
    %v58 = vunpack.c.l.bf16 %v51
    %v59 = vunpack.c.l.bf16 %v52
    %vm60 = vcmask 424960
    %v62 = vsel %vm60, %v43, 0
    %v65 = vsel %vm60, %v44, 0
    %v68 = vsel %vm60, %v45, 0
    %vm70 = vcmask 1043456
    %v72 = vsel %vm70, %v59, 0
    %74 = vmatprep.subr.mxu0 0.0
    %75 = vmatpush1.msra.mxu0 0.0
    %76 = vmatprep.subr.mxu0 0.0
    %77 = vmatpush1.msra.mxu0 0.0
    %78 = vmatprep.subr.mxu0 0.0
    %79 = vmatpush1.msra.mxu0 0.0
    %80 = vmatprep.subr.mxu0 0.0
    %81 = vmatpush1.msra.mxu0 0.0
    %82 = vmatprep.subr.mxu0 0.0
    %83 = vmatpush1.msra.mxu0 0.0
    %84 = vmatprep.subr.mxu0 0.0
    %85 = vmatpush1.msra.mxu0 0.0
    %86 = vmatprep.subr.mxu0 0.0
    %87 = vmatpush1.msra.mxu0 0.0
    %88 = vmatprep.subr.mxu0 0.0
    %89 = vmatpush1.msra.mxu0 0.0
    %90 = vmatprep.subr.mxu0 0.0
    %91 = vmatpush1.msra.mxu0 0.0
    %92 = vmatprep.subr.mxu0 0.0
    %93 = vmatpush1.msra.mxu0 %v72
    %94 = vmatprep.subr.mxu0 0.0
    %95 = vmatpush1.msra.mxu0 %v58
    %96 = vmatprep.subr.mxu0 0.0
    %97 = vmatpush1.msra.mxu0 %v57
    %98 = vmatprep.subr.mxu0 0.0
    %99 = vmatpush1.msra.mxu0 %v56
    %100 = vmatprep.subr.mxu0 0.0
    %101 = vmatpush1.msra.mxu0 %v55
    %102 = vmatprep.subr.mxu0 0.0
    %103 = vmatpush1.msra.mxu0 %v54
    %104 = vmatprep.subr.mxu0 0.0
    %105 = vmatpush1.msra.mxu0 %v53
    %106 = vmatprep.subr.mxu0 0.0
    %107 = vmatpush2.msra.mxu0 0.0
    %108 = vmatprep.subr.mxu0 0.0
    %109 = vmatpush2.msra.mxu0 0.0
    %110 = vmatprep.subr.mxu0 0.0
    %111 = vmatpush2.msra.mxu0 0.0
    %112 = vmatprep.subr.mxu0 0.0
    %113 = vmatpush2.msra.mxu0 0.0
    %114 = vmatprep.subr.mxu0 0.0
    %115 = vmatpush2.msra.mxu0 0.0
    %116 = vmatprep.subr.mxu0 0.0
    %117 = vmatpush2.msra.mxu0 0.0
    %118 = vmatprep.subr.mxu0 0.0
    %119 = vmatpush2.msra.mxu0 0.0
    %120 = vmatprep.subr.mxu0 0.0
    %121 = vmatpush2.msra.mxu0 0.0
    %122 = vmatprep.subr.mxu0 0.0
    %123 = vmatpush2.msra.mxu0 0.0
    %124 = vmatprep.subr.mxu0 0.0
    %125 = vmatpush2.msra.mxu0 0.0
    %126 = vmatprep.subr.mxu0 0.0
    %127 = vmatpush2.msra.mxu0 0.0
    %128 = vmatprep.subr.mxu0 0.0
    %129 = vmatpush2.msra.mxu0 0.0
    %130 = vmatprep.subr.mxu0 0.0
    %131 = vmatpush2.msra.mxu0 0.0
    %132 = vmatprep.subr.mxu0 0.0
    %133 = vmatpush2.msra.mxu0 0.0
    %134 = vmatprep.subr.mxu0 0.0
    %135 = vmatpush2.msra.mxu0 0.0
    %136 = vmatprep.subr.mxu0 0.0
    %137 = vmatpush2.msra.mxu0 0.0
    %138 = vmatprep.mubr.f32.mxu0 0.0
    %139 = vmatmul.mubr.f32.gmra.mxu0 %v62
    %v140 = vpop.f32.mrf.mxu0
    %v141 = vadd.f32 0.0, %v140
    %v142 = vpop.f32.mrf.mxu0
    %143 = vmatprep.mubr.f32.mxu0 0.0
    %144 = vmatmul.mubr.f32.gmra.mxu0 %v65
    %v145 = vpop.f32.mrf.mxu0
    %v146 = vadd.f32 0.0, %v145
    %v147 = vpop.f32.mrf.mxu0
    %148 = vmatprep.mubr.f32.mxu0 0.0
    %149 = vmatmul.mubr.f32.gmra.mxu0 %v68
    %v150 = vpop.f32.mrf.mxu0
    %v151 = vadd.f32 0.0, %v150
    %v152 = vpop.f32.mrf.mxu0
    %153 = vdwg.mxu0
    %v154 = vld [vmem:[%s2] sm:$0xff]
    %vm155 = vcmp.gt.f32.partialorder %v154, 0.0
    %v156 = vsub.f32 1.0, %v141
    %v157 = vsel %vm155, 1, 0
    %158 = vset.pattern.permute.xlu0 0
    %159 = vperm.xlu0 %158, %v157
    %v160 = vpop.permute.xlu0 %159
    %vm161 = vcmp.eq.s32.totalorder %v160, 1
    %v162 = vsel %vm161, %v156, %v43
    %163 = vst.msk [vmem:[#allocation7] sm:$0xff] %vm60, %v162
    %v164 = vsel %vm161, %v146, %v44
    %165 = vst.msk [vmem:[#allocation7 + $0x8] sm:$0xff] %vm60, %v164
    %v166 = vsel %vm161, %v151, %v45
    %167 = vst.msk [vmem:[#allocation7 + $0x10] sm:$0xff] %vm60, %v166
    // Predicated region
    $region22: #{tpu_custom_call.1} parent=1 // pred_check
      _
    $region23: #{tpu_custom_call.1} parent=1 // pred_check_branch
      %169 = sbr.rel (0) target = $region25
    $region24: #{tpu_custom_call.1} parent=1 // pred_region
      %s171 = ssub.s32 384, 384
      %172 = vsyncadd [#allocation4], %s171
      %s173 = sshll.u32 [#allocation7], 4
      %s174 = int_to_ptr.vmem [resolvable:$true] %s173
      %179 = dma.vmem_to_hbm [thread:$0]  %s174, 384, %s3, [#allocation4], 128, 128, 8
    $region25: #{tpu_custom_call.1} parent=1 // pred_fallthru
      _
    // Predicated region
    $region26: #{tpu_custom_call.1} parent=1 // pred_check
      _
    $region27: #{tpu_custom_call.1} parent=1 // pred_check_branch
      %181 = sbr.rel (0) target = $region29
    $region28: #{tpu_custom_call.1} parent=1 // pred_region
      %182 = dma.done [#allocation4], 384
    $region29: #{tpu_custom_call.1} parent=1 // pred_fallthru
      _
    %183 = vsyncpa [#allocation3], 1
    %184 = vsyncpa [#allocation6], 1
    %185 = vsyncpa [#allocation4], 1

</llo_original>
